<compile_context>
chip_gen: v6e
topology: v6e:2x2x1
jax: 0.10.0
libtpu: 0.0.40
codegen_flags: <defaults>
</compile_context>

<pallas_src>
import functools

import jax
import jax.numpy as jnp
from jax import lax
from jax.experimental import pallas as pl
from jax.experimental.pallas import tpu as pltpu


def _round_up(x, m):
    return (x + m - 1) // m * m


def _vmem_caps():
    """Return (tile_budget_bytes, vmem_limit_bytes) sized per TPU generation."""
    try:
        cap = int(pltpu.get_tpu_info().vmem_capacity_bytes)  # 128 MiB v5e/v6e, 64 MiB v7x
    except Exception:
        cap = 64 << 20  # conservative fallback (tightest generation, v7x)
    tile_budget = int(cap * 0.55)                 # double-buffered tiles live here
    vmem_limit = min(int(cap * 0.90), 100 << 20)  # raise the scoped-VMEM limit
    return tile_budget, vmem_limit


def _gcn_kernel(*refs, ax_first, activation, compute_dtype, n_nodes, tk):
    # ax_first=True : refs = (A tile, x tile, W^T, bias, out, acc)
    # ax_first=False: refs = (A tile, XW tile,      bias, out, acc)
    if ax_first:
        a_ref, x_ref, w_ref, b_ref, o_ref, acc_ref = refs
    else:
        a_ref, x_ref, b_ref, o_ref, acc_ref = refs
        w_ref = None

    k = pl.program_id(2)
    nk = pl.num_programs(2)

    a = a_ref[...]                    # (TM, TK) adjacency tile (this batch)
    if compute_dtype is not None:
        a = a.astype(compute_dtype)   # in-kernel cast: A stays f32 in HBM (one read)
    s = x_ref[...]                    # (TK, Din) x tile  /  (TK, Dp) hoisted x@W^T tile

    # Ragged last K tile: the out-of-bounds part of the block is undefined, so
    # zero BOTH operands (0*garbage could be NaN otherwise). Static no-op when
    # TK divides N.
    if n_nodes % tk != 0:
        valid = n_nodes - k * tk
        col = lax.broadcasted_iota(jnp.int32, a.shape, 1)
        a = jnp.where(col < valid, a, jnp.zeros_like(a))
        row = lax.broadcasted_iota(jnp.int32, s.shape, 0)
        s = jnp.where(row < valid, s, jnp.zeros_like(s))

    @pl.when(k == 0)
    def _():
        acc_ref[...] = jnp.zeros_like(acc_ref)

    acc_ref[...] += jnp.dot(a, s, preferred_element_type=jnp.float32)

    @pl.when(k == nk - 1)
    def _():
        acc = acc_ref[...]
        if ax_first:
            # (A@x) @ W^T : one (TM, Din) x (Din, Dp) matmul per row tile.
            y = jnp.dot(acc.astype(w_ref.dtype), w_ref[...],
                        preferred_element_type=jnp.float32)
        else:
            y = acc                    # A @ (x@W^T) already accumulated
        y = y + b_ref[...]             # f32 bias add (VPU)
        act = jnp.tanh(y) if activation == "tanh" else jax.nn.sigmoid(y)  # EUP
        o_ref[...] = act.astype(o_ref.dtype)


def gcn_forward(x, A, weight, bias, *, activation="sigmoid", matmul_dtype=None,
                out_dtype=jnp.float32, return_padded=False, tm=None, tk=None):
    """x: (B, N, Din), A: (B, N, N), weight: (Dout, Din), bias: (Dout,).

    Returns sigmoid/tanh(bmm(A, x) @ weight.T + bias) with shape (B, N, Dout)
    (or (B, N, Dp) if return_padded=True). `matmul_dtype=jnp.bfloat16` runs the
    MXU in bf16 (f32 accumulation; A is cast per-tile inside the kernel).
    """
    B, N, Din = x.shape
    Dout = weight.shape[0]
    Dp = _round_up(Dout, 128)          # lane-dense (unmasked) output stores

    cd = matmul_dtype
    e_a = jnp.dtype(cd).itemsize if cd is not None else A.dtype.itemsize
    e_x = jnp.dtype(cd).itemsize if cd is not None else x.dtype.itemsize
    e_o = jnp.dtype(out_dtype).itemsize

    # True-FLOP association choice: contract the N^2 term against the narrower
    # of Din / Dout (not the padded Dp).
    ax_first = Din <= Dout

    # Pre-transposed, lane-padded Linear weight and bias (wrapper-side, once).
    wt = jnp.zeros((Din, Dp), weight.dtype).at[:, :Dout].set(weight.T)
    bp = jnp.zeros((1, Dp), jnp.float32).at[0, :Dout].set(bias.astype(jnp.float32))

    if ax_first:
        x_op = x.astype(cd) if cd is not None else x
        w_op = wt.astype(cd) if cd is not None else wt
        k2 = Din                       # lane width of the kernel's 2nd operand
        acc_w = Din
    else:
        # Hoist x @ W^T: computed once per batch (not once per row tile).
        xcd = x.astype(cd) if cd is not None else x
        wcd = wt.astype(cd) if cd is not None else wt
        xw = jnp.einsum("bnd,do->bno", xcd, wcd,
                        preferred_element_type=jnp.float32)
        x_op = xw.astype(cd) if cd is not None else xw
        w_op = None
        k2 = Dp
        acc_w = Dp

    # ---- tile sizes from a per-generation VMEM budget -----------------------
    tile_budget, vmem_limit = _vmem_caps()
    TM = tm if tm is not None else min(N, 256)      # fills the 256-row MXU
    if tk is not None:
        TK = tk
    else:
        fixed = 2 * TM * Dp * e_o + TM * acc_w * 4 + 2 * Dp * 4
        if ax_first:
            fixed += 2 * Din * Dp * e_x
        per_k = 2 * TM * e_a + 2 * k2 * e_x         # double-buffered A + x/xw tiles
        TK = max((tile_budget - fixed) // per_k, 128)
        TK = max((TK // 128) * 128, 128)
        if TK >= N:
            TK = N                                  # single K step, full extent

    grid = (B, pl.cdiv(N, TM), pl.cdiv(N, TK))

    a_spec = pl.BlockSpec((pl.Squeezed(), TM, TK), lambda b, i, k: (b, i, k))
    s_spec = pl.BlockSpec((pl.Squeezed(), TK, k2), lambda b, i, k: (b, k, 0))
    b_spec = pl.BlockSpec((1, Dp), lambda b, i, k: (0, 0))
    o_spec = pl.BlockSpec((pl.Squeezed(), TM, Dp), lambda b, i, k: (b, i, 0))

    if ax_first:
        w_spec = pl.BlockSpec((Din, Dp), lambda b, i, k: (0, 0))
        in_specs = [a_spec, s_spec, w_spec, b_spec]
        operands = (A, x_op, w_op, bp)
    else:
        in_specs = [a_spec, s_spec, b_spec]
        operands = (A, x_op, bp)

    kernel = functools.partial(_gcn_kernel, ax_first=ax_first,
                               activation=activation, compute_dtype=cd,
                               n_nodes=N, tk=TK)

    if ax_first:
        flops = 2 * B * N * N * Din + 2 * B * N * Din * Dp
    else:
        flops = 2 * B * N * N * Dp
    bytes_accessed = (int(A.size) * A.dtype.itemsize
                      + int(x_op.size) * jnp.dtype(x_op.dtype).itemsize
                      + B * N * Dp * e_o + Din * Dp * e_x + Dp * 4)
    cost = pl.CostEstimate(flops=int(flops), transcendentals=int(B * N * Dp),
                           bytes_accessed=int(bytes_accessed))

    out_padded = pl.pallas_call(
        kernel,
        out_shape=jax.ShapeDtypeStruct((B, N, Dp), out_dtype),
        grid_spec=pltpu.PrefetchScalarGridSpec(
            num_scalar_prefetch=0,
            grid=grid,
            in_specs=in_specs,
            out_specs=o_spec,
            scratch_shapes=[pltpu.VMEM((TM, acc_w), jnp.float32)],
        ),
        compiler_params=pltpu.CompilerParams(
            dimension_semantics=("parallel", "parallel", "arbitrary"),
            vmem_limit_bytes=int(vmem_limit),
        ),
        cost_estimate=cost,
    )(*operands)

    if return_padded or Dp == Dout:
        return out_padded
    return out_padded[:, :, :Dout]


def gcn_reference(x, A, weight, bias, activation="sigmoid"):
    ax = jnp.einsum("bnm,bmd->bnd", A, x)
    y = jnp.einsum("bnd,od->bno", ax, weight) + bias
    return jnp.tanh(y) if activation == "tanh" else jax.nn.sigmoid(y)


if __name__ == "__main__":
    def make_inputs(key, B, N, Din, Dout):
        kx, ka, kw, kb = jax.random.split(key, 4)
        x = jax.random.normal(kx, (B, N, Din), dtype=jnp.float32)
        A_raw = jax.random.uniform(ka, (B, N, N), dtype=jnp.float32)
        A = A_raw / jnp.sum(A_raw, axis=-1, keepdims=True)  # row-normalized adjacency
        bound = 1.0 / jnp.sqrt(jnp.float32(Din))             # nn.Linear-style init
        weight = jax.random.uniform(kw, (Dout, Din), minval=-bound, maxval=bound,
                                    dtype=jnp.float32)
        bias = jax.random.uniform(kb, (Dout,), minval=-bound, maxval=bound,
                                  dtype=jnp.float32)
        return x, A, weight, bias

    k1, k2, k3 = jax.random.split(jax.random.PRNGKey(0), 3)

    # 1) Base config (ax_first path): f32, bf16 MXU path, tanh activation.
    x, A, w, b = make_inputs(k1, 2, 8, 16, 32)
    ref = gcn_reference(x, A, w, b)
    out = jax.block_until_ready(gcn_forward(x, A, w, b))
    assert out.shape == (2, 8, 32)
    assert jnp.allclose(out, ref, atol=1e-5, rtol=1e-5)

    out_bf16 = jax.block_until_ready(gcn_forward(x, A, w, b, matmul_dtype=jnp.bfloat16))
    assert out_bf16.shape == (2, 8, 32)
    assert jnp.allclose(out_bf16, ref, atol=2e-2, rtol=2e-2)

    ref_t = gcn_reference(x, A, w, b, activation="tanh")
    out_t = jax.block_until_ready(gcn_forward(x, A, w, b, activation="tanh"))
    assert jnp.allclose(out_t, ref_t, atol=1e-5, rtol=1e-5)

    # 2) Hoisted x@W^T path (Dout < Din  =>  A @ (x@W^T) in the kernel).
    x2, A2, w2, b2 = make_inputs(k2, 2, 8, 48, 16)
    ref2 = gcn_reference(x2, A2, w2, b2)
    out2 = jax.block_until_ready(gcn_forward(x2, A2, w2, b2))
    assert out2.shape == (2, 8, 16)
    assert jnp.allclose(out2, ref2, atol=1e-5, rtol=1e-5)

    # 3) K-tiled path with ragged row and K tiles (forced small tiles so the
    #    accumulator init/finalize and the in-kernel K masking are exercised).
    x3, A3, w3, b3 = make_inputs(k3, 2, 160, 16, 32)
    ref3 = gcn_reference(x3, A3, w3, b3)
    out3 = jax.block_until_ready(gcn_forward(x3, A3, w3, b3, tm=64, tk=128))
    assert out3.shape == (2, 160, 32)
    assert jnp.allclose(out3, ref3, atol=1e-4, rtol=1e-4)

    print("KERNEL_OK")
</pallas_src>

<mosaic_0001>
module attributes {stable_mosaic.version = 11 : i64} {
  func.func @_gcn_kernel(%arg0: i32, %arg1: i32, %arg2: i32, %arg3: memref<1x8x8xf32, #tpu.memory_space<vmem>>, %arg4: memref<1x8x16xf32, #tpu.memory_space<vmem>>, %arg5: memref<16x128xf32, #tpu.memory_space<vmem>>, %arg6: memref<1x128xf32, #tpu.memory_space<vmem>>, %arg7: memref<1x8x128xf32, #tpu.memory_space<vmem>>, %arg8: memref<8x16xf32, #tpu.memory_space<vmem>>) attributes {dimension_semantics = [#tpu.dimension_semantics<parallel>, #tpu.dimension_semantics<parallel>, #tpu.dimension_semantics<arbitrary>], iteration_bounds = array<i64: 2, 1, 1>, scalar_prefetch = 0 : i64, scratch_operands = 1 : i64, tpu.core_type = #tpu.core_type<tc>, window_params = [{transform_indices = @transform_0, window_bounds = array<i64: 1, 8, 8>}, {transform_indices = @transform_1, window_bounds = array<i64: 1, 8, 16>}, {pipeline_mode = #tpu.pipeline_mode<synchronous>, transform_indices = @transform_2, window_bounds = array<i64: 16, 128>}, {pipeline_mode = #tpu.pipeline_mode<synchronous>, transform_indices = @transform_3, window_bounds = array<i64: 1, 128>}, {transform_indices = @transform_4, window_bounds = array<i64: 1, 8, 128>}]} {
    %c0 = arith.constant 0 : index
    %c0_0 = arith.constant 0 : index
    %c0_1 = arith.constant 0 : index
    %0 = vector.load %arg3[%c0, %c0_0, %c0_1] : memref<1x8x8xf32, #tpu.memory_space<vmem>>, vector<1x8x8xf32>
    %1 = vector.shape_cast %0 : vector<1x8x8xf32> to vector<8x8xf32>
    %c0_2 = arith.constant 0 : index
    %c0_3 = arith.constant 0 : index
    %c0_4 = arith.constant 0 : index
    %2 = vector.load %arg4[%c0_2, %c0_3, %c0_4] : memref<1x8x16xf32, #tpu.memory_space<vmem>>, vector<1x8x16xf32>
    %3 = vector.shape_cast %2 : vector<1x8x16xf32> to vector<8x16xf32>
    %c0_i32 = arith.constant 0 : i32
    %4 = arith.cmpi eq, %arg2, %c0_i32 : i32
    %5 = arith.extui %4 : i1 to i32
    %c0_i32_5 = arith.constant 0 : i32
    %6 = arith.cmpi ne, %5, %c0_i32_5 : i32
    scf.if %6 {
      %cst_12 = arith.constant 0.000000e+00 : f32
      %14 = vector.broadcast %cst_12 : f32 to vector<8x16xf32>
      %c0_13 = arith.constant 0 : index
      %c0_14 = arith.constant 0 : index
      %15 = vector.load %arg8[%c0_13, %c0_14] : memref<8x16xf32, #tpu.memory_space<vmem>>, vector<8x16xf32>
      tpu.vector_store %arg8[%c0_13, %c0_14], %14 {strides = array<i32>} : memref<8x16xf32, #tpu.memory_space<vmem>>, vector<8x16xf32>,
    } else {
    }
    %c0_6 = arith.constant 0 : index
    %c0_7 = arith.constant 0 : index
    %7 = vector.load %arg8[%c0_6, %c0_7] : memref<8x16xf32, #tpu.memory_space<vmem>>, vector<8x16xf32>
    %cst = arith.constant dense<0.000000e+00> : vector<8x16xf32>
    %8 = tpu.matmul %1, %3, %cst {dimension_numbers = #tpu.dot_dimension_numbers<[1], [0], [0], [1], [0, 0, 1, 1], [], []>} : vector<8x8xf32>, vector<8x16xf32>, vector<8x16xf32> -> vector<8x16xf32>
    %9 = arith.addf %7, %8 : vector<8x16xf32>
    %c0_8 = arith.constant 0 : index
    %c0_9 = arith.constant 0 : index
    %10 = vector.load %arg8[%c0_8, %c0_9] : memref<8x16xf32, #tpu.memory_space<vmem>>, vector<8x16xf32>
    tpu.vector_store %arg8[%c0_8, %c0_9], %9 {strides = array<i32>} : memref<8x16xf32, #tpu.memory_space<vmem>>, vector<8x16xf32>,
    %c0_i32_10 = arith.constant 0 : i32
    %11 = arith.cmpi eq, %arg2, %c0_i32_10 : i32
    %12 = arith.extui %11 : i1 to i32
    %c0_i32_11 = arith.constant 0 : i32
    %13 = arith.cmpi ne, %12, %c0_i32_11 : i32
    scf.if %13 {
      %c0_12 = arith.constant 0 : index
      %c0_13 = arith.constant 0 : index
      %14 = vector.load %arg8[%c0_12, %c0_13] : memref<8x16xf32, #tpu.memory_space<vmem>>, vector<8x16xf32>
      %c0_14 = arith.constant 0 : index
      %c0_15 = arith.constant 0 : index
      %15 = vector.load %arg5[%c0_14, %c0_15] : memref<16x128xf32, #tpu.memory_space<vmem>>, vector<16x128xf32>
      %cst_16 = arith.constant dense<0.000000e+00> : vector<8x128xf32>
      %16 = tpu.matmul %14, %15, %cst_16 {dimension_numbers = #tpu.dot_dimension_numbers<[1], [0], [0], [1], [0, 0, 1, 1], [], []>} : vector<8x16xf32>, vector<16x128xf32>, vector<8x128xf32> -> vector<8x128xf32>
      %c0_17 = arith.constant 0 : index
      %c0_18 = arith.constant 0 : index
      %17 = vector.load %arg6[%c0_17, %c0_18] : memref<1x128xf32, #tpu.memory_space<vmem>>, vector<1x128xf32>
      %18 = vector.broadcast %17 : vector<1x128xf32> to vector<8x128xf32>
      %19 = arith.addf %16, %18 : vector<8x128xf32>
      %20 = arith.negf %19 : vector<8x128xf32>
      %21 = math.exp %20 : vector<8x128xf32>
      %cst_19 = arith.constant 1.000000e+00 : f32
      %22 = vector.broadcast %cst_19 : f32 to vector<8x128xf32>
      %23 = arith.addf %22, %21 : vector<8x128xf32>
      %24 = arith.divf %22, %23 : vector<8x128xf32>
      %c0_20 = arith.constant 0 : index
      %c0_21 = arith.constant 0 : index
      %c0_22 = arith.constant 0 : index
      %25 = vector.load %arg7[%c0_20, %c0_21, %c0_22] : memref<1x8x128xf32, #tpu.memory_space<vmem>>, vector<1x8x128xf32>
      %26 = vector.shape_cast %25 : vector<1x8x128xf32> to vector<8x128xf32>
      %27 = vector.shape_cast %24 : vector<8x128xf32> to vector<1x8x128xf32>
      tpu.vector_store %arg7[%c0_20, %c0_21, %c0_22], %27 {strides = array<i32>} : memref<1x8x128xf32, #tpu.memory_space<vmem>>, vector<1x8x128xf32>,
    } else {
    }
    return
  }
  func.func @transform_0(%arg0: i32, %arg1: i32, %arg2: i32) -> (i32, i32, i32) {
    %c0_i32 = arith.constant 0 : i32
    return %arg0, %arg1, %arg2 : i32, i32, i32
  }
  func.func @transform_1(%arg0: i32, %arg1: i32, %arg2: i32) -> (i32, i32, i32) {
    %c0_i32 = arith.constant 0 : i32
    %c0_i32_0 = arith.constant 0 : i32
    return %arg0, %arg2, %c0_i32 : i32, i32, i32
  }
  func.func @transform_2(%arg0: i32, %arg1: i32, %arg2: i32) -> (i32, i32) {
    %c0_i32 = arith.constant 0 : i32
    %c0_i32_0 = arith.constant 0 : i32
    %c0_i32_1 = arith.constant 0 : i32
    return %c0_i32, %c0_i32_0 : i32, i32
  }
  func.func @transform_3(%arg0: i32, %arg1: i32, %arg2: i32) -> (i32, i32) {
    %c0_i32 = arith.constant 0 : i32
    %c0_i32_0 = arith.constant 0 : i32
    %c0_i32_1 = arith.constant 0 : i32
    return %c0_i32, %c0_i32_0 : i32, i32
  }
  func.func @transform_4(%arg0: i32, %arg1: i32, %arg2: i32) -> (i32, i32, i32) {
    %c0_i32 = arith.constant 0 : i32
    %c0_i32_0 = arith.constant 0 : i32
    return %arg0, %arg1, %c0_i32 : i32, i32, i32
  }
}

</mosaic_0001>

<llo_original>
// kernel: tpu_custom_call.1
$region0: #{tpu_custom_call.1}
  #allocation0 [shape = 'u32[]', space=smem, size = 0x4, offset = 0x4, fixed_abs, tag = 'smem constant byte address 0x4 - core index']
  #allocation1 [shape = 'u32[144,128]{1,0:T(1,128)}', space=vmem, size = 0x12000, scoped, tag = 'internal scratch']
  #allocation2 [shape = 'f32[8,16]{1,0:T(8,128)}', space=vmem, size = 0x1000, scoped, tag = 'scratch operand']
  %s0 = inlined_call_operand.hbm [shape: f32[2,8,8], index: 0, kind: input, shape index: {}]
  %s1 = inlined_call_operand.hbm [shape: f32[2,8,16], index: 1, kind: input, shape index: {}]
  %s2 = inlined_call_operand.hbm [shape: f32[16,128], index: 2, kind: input, shape index: {}]
  %s3 = inlined_call_operand.vmem [shape: f32[1,128], index: 3, kind: input, shape index: {}]
  %s4 = inlined_call_operand.hbm [shape: f32[2,8,128], index: 4, kind: output, shape index: {}]
  %s5 = sld [smem:[#allocation0]]
  $region69: #{tpu_custom_call.1} parent=0
    _
  %s7 = ssub.s32 1, %s5
  %s8 = scalar_select 0, %s7, %s5
  $region1: #{tpu_custom_call.1} parent=0
    #allocation3 [shape = 'u8[8192]{0}', space=vmem, size = 0x2000, scoped, tag = 'input window, operand 0']
    #allocation4 [shape = 's32[2]{0}', space=sflag, size = 0x8, scoped, tag = 'scoped memory for tpu_custom_call.1']
    #allocation5 [shape = 's32[2]{0}', space=sflag, size = 0x8, scoped, tag = 'scoped memory for tpu_custom_call.1']
    #allocation6 [shape = 'u8[8192]{0}', space=vmem, size = 0x2000, scoped, tag = 'input window, operand 1']
    #allocation7 [shape = 's32[2]{0}', space=sflag, size = 0x8, scoped, tag = 'scoped memory for tpu_custom_call.1']
    #allocation8 [shape = 'u8[8192]{0}', space=vmem, size = 0x2000, scoped, tag = 'input window, operand 2, single buffered']
    #allocation9 [shape = 'u8[8192]{0}', space=vmem, size = 0x2000, scoped, tag = 'output window, operand 0']
    %9 = vsyncpa [#allocation4], 0
    %s10 = scalar_lea.sflag [#allocation4], 1
    %11 = vsyncpa %s10, 0
    %12 = vsyncpa [#allocation7], 0
    %s13 = scalar_lea.sflag [#allocation7], 1
    %14 = vsyncpa %s13, 0
    %15 = vsyncpa [#allocation5], 0
    %s16 = scalar_lea.sflag [#allocation5], 1
    %17 = vsyncpa %s16, 0
    loop: start=0, step=1, limit=4
    $region2: #{tpu_custom_call.1} parent=1 // loop_pre_header
      _
    $region3: #{tpu_custom_call.1} parent=1 // loop_header
      %s19 = sphi 0, %s23
      %p20 = scmp.ge.s32.totalorder %s19, 4
      %s26 = sphi 0, %s45
      %s27 = sphi 0, %s41
      %s28 = sphi 0, %s37
      %s29 = sphi 0, %s26
      %s30 = sphi 0, %s27
      %s31 = sphi 0, %s28
      %s32 = sphi 0, %s29
      %s33 = sphi 0, %s30
      %s34 = sphi 0, %s31
      %s52 = sphi 0, %s54
      %s55 = sphi 0, %s52
      %s56 = sphi 0, %s55
      %s72 = sphi 0, %s56
      %s80 = sphi 0, %s82
      %s83 = sphi 0, %s80
      %s84 = sphi 0, %s83
      %s100 = sphi 0, %s84
      %s104 = sphi 0, %s104
      %s106 = sphi 0, %s104
      %s107 = sphi 0, %s106
      %s121 = sphi 0, %s107
      %s125 = sphi 0, %s125
      %s127 = sphi 0, %s125
      %s128 = sphi 0, %s127
      %s142 = sphi 0, %s128
      %s150 = sphi 0, %s152
      %s153 = sphi 0, %s150
      %s154 = sphi 0, %s153
      %s170 = sphi 0, %s154
    $region4: #{tpu_custom_call.1} parent=1 // loop_header_branch
      %22 = sbr.rel (%p20) target = $region8
    $region5: #{tpu_custom_call.1} parent=1 // loop_body
      %s24 = ssub.s32 %s19, 1
      %s25 = ssub.s32 %s19, 2
      %s35 = sadd.s32 1, %s28
      %p36 = scmp.ge.s32.totalorder %s35, 1
      %s37 = scalar_select %p36, 0, %s35
      %s38 = sadd.s32 1, %s27
      %s39 = scalar_select %p36, %s38, %s27
      %p40 = scmp.ge.s32.totalorder %s39, 1
      %s41 = scalar_select %p40, 0, %s39
      %s42 = sadd.s32 1, %s26
      %s43 = scalar_select %p40, %s42, %s26
      %p44 = scmp.ge.s32.totalorder %s43, 2
      %s45 = scalar_select %p44, 0, %s43
      %s46 = ssub.s32 %s26, %s45
      %s47 = ssub.s32 %s27, %s41
      %s48 = sor.u32 %s46, %s47
      %s49 = ssub.s32 %s28, %s37
      %s50 = sor.u32 %s48, %s49
      %p51 = scmp.eq.s32.totalorder %s50, 0
      %s53 = sadd.s32 %s52, 1
      %s54 = scalar_select %p51, %s52, %s53
      %p57 = pneg %p51
      %p58 = scmp.eq.s32.totalorder %s19, 1
      %p59 = por %p57, %p58
      %p60 = scmp.ne.s32.totalorder %s52, %s55
      %p61 = scmp.eq.s32.totalorder %s19, 0
      %p62 = por %p60, %p61
      %p63 = scmp.ne.s32.totalorder %s52, %s55
      %p64 = scmp.eq.s32.totalorder %s24, 1
      %p65 = por %p63, %p64
      %p66 = scmp.ne.s32.totalorder %s55, %s56
      %p67 = scmp.eq.s32.totalorder %s24, 0
      %p68 = por %p66, %p67
      %p69 = scmp.ne.s32.totalorder %s55, %s56
      %p70 = scmp.eq.s32.totalorder %s25, 1
      %p71 = por %p69, %p70
      %p73 = scmp.ne.s32.totalorder %s56, %s72
      %p74 = scmp.eq.s32.totalorder %s25, 0
      %p75 = por %p73, %p74
      %s76 = ssub.s32 %s26, %s45
      %s77 = ssub.s32 %s28, %s37
      %s78 = sor.u32 %s76, %s77
      %p79 = scmp.eq.s32.totalorder %s78, 0
      %s81 = sadd.s32 %s80, 1
      %s82 = scalar_select %p79, %s80, %s81
      %p85 = pneg %p79
      %p86 = scmp.eq.s32.totalorder %s19, 1
      %p87 = por %p85, %p86
      %p88 = scmp.ne.s32.totalorder %s80, %s83
      %p89 = scmp.eq.s32.totalorder %s19, 0
      %p90 = por %p88, %p89
      %p91 = scmp.ne.s32.totalorder %s80, %s83
      %p92 = scmp.eq.s32.totalorder %s24, 1
      %p93 = por %p91, %p92
      %p94 = scmp.ne.s32.totalorder %s83, %s84
      %p95 = scmp.eq.s32.totalorder %s24, 0
      %p96 = por %p94, %p95
      %p97 = scmp.ne.s32.totalorder %s83, %s84
      %p98 = scmp.eq.s32.totalorder %s25, 1
      %p99 = por %p97, %p98
      %p101 = scmp.ne.s32.totalorder %s84, %s100
      %p102 = scmp.eq.s32.totalorder %s25, 0
      %p103 = por %p101, %p102
      %s105 = sadd.s32 %s104, 1
      %p108 = scmp.eq.s32.totalorder %s19, 1
      %p109 = scmp.ne.s32.totalorder %s104, %s106
      %p110 = scmp.eq.s32.totalorder %s19, 0
      %p111 = por %p109, %p110
      %p112 = scmp.ne.s32.totalorder %s104, %s106
      %p113 = scmp.eq.s32.totalorder %s24, 1
      %p114 = por %p112, %p113
      %p115 = scmp.ne.s32.totalorder %s106, %s107
      %p116 = scmp.eq.s32.totalorder %s24, 0
      %p117 = por %p115, %p116
      %p118 = scmp.ne.s32.totalorder %s106, %s107
      %p119 = scmp.eq.s32.totalorder %s25, 1
      %p120 = por %p118, %p119
      %p122 = scmp.ne.s32.totalorder %s107, %s121
      %p123 = scmp.eq.s32.totalorder %s25, 0
      %p124 = por %p122, %p123
      %s126 = sadd.s32 %s125, 1
      %p129 = scmp.eq.s32.totalorder %s19, 1
      %p130 = scmp.ne.s32.totalorder %s125, %s127
      %p131 = scmp.eq.s32.totalorder %s19, 0
      %p132 = por %p130, %p131
      %p133 = scmp.ne.s32.totalorder %s125, %s127
      %p134 = scmp.eq.s32.totalorder %s24, 1
      %p135 = por %p133, %p134
      %p136 = scmp.ne.s32.totalorder %s127, %s128
      %p137 = scmp.eq.s32.totalorder %s24, 0
      %p138 = por %p136, %p137
      %p139 = scmp.ne.s32.totalorder %s127, %s128
      %p140 = scmp.eq.s32.totalorder %s25, 1
      %p141 = por %p139, %p140
      %p143 = scmp.ne.s32.totalorder %s128, %s142
      %p144 = scmp.eq.s32.totalorder %s25, 0
      %p145 = por %p143, %p144
      %s146 = ssub.s32 %s26, %s45
      %s147 = ssub.s32 %s27, %s41
      %s148 = sor.u32 %s146, %s147
      %p149 = scmp.eq.s32.totalorder %s148, 0
      %s151 = sadd.s32 %s150, 1
      %s152 = scalar_select %p149, %s150, %s151
      %p155 = pneg %p149
      %p156 = scmp.eq.s32.totalorder %s19, 1
      %p157 = por %p155, %p156
      %p158 = scmp.ne.s32.totalorder %s150, %s153
      %p159 = scmp.eq.s32.totalorder %s19, 0
      %p160 = por %p158, %p159
      %p161 = scmp.ne.s32.totalorder %s150, %s153
      %p162 = scmp.eq.s32.totalorder %s24, 1
      %p163 = por %p161, %p162
      %p164 = scmp.ne.s32.totalorder %s153, %s154
      %p165 = scmp.eq.s32.totalorder %s24, 0
      %p166 = por %p164, %p165
      %p167 = scmp.ne.s32.totalorder %s153, %s154
      %p168 = scmp.eq.s32.totalorder %s25, 1
      %p169 = por %p167, %p168
      %p171 = scmp.ne.s32.totalorder %s154, %s170
      %p172 = scmp.eq.s32.totalorder %s25, 0
      %p173 = por %p171, %p172
      %p174 = scmp.le.s32.totalorder 1, %s19
      %p175 = scmp.lt.s32.totalorder %s19, 3
      %p176 = pnand %p174, %p175
      %p177 = pneg %p176
      // Predicated region
      $region9: #{tpu_custom_call.1} parent=5 // pred_check
        _
      $region10: #{tpu_custom_call.1} parent=5 // pred_check_branch
        %179 = sbr.rel (%p176) target = $region12
      $region11: #{tpu_custom_call.1} parent=5 // pred_region
        %s180 = ssub.s32 %s19, 1
        // Predicated region
        $region13: #{tpu_custom_call.1} parent=11 // pred_check
          %p181 = pneg %p117
        $region14: #{tpu_custom_call.1} parent=11 // pred_check_branch
          %183 = sbr.rel (%p181) target = $region16
        $region15: #{tpu_custom_call.1} parent=11 // pred_region
          %s185 = ssub.s32 256, 256
          %186 = vsyncadd [#allocation7], %s185
          %s187 = sshll.u32 [#allocation8], 4
          %s188 = int_to_ptr.vmem [resolvable:$true] %s187
          %193 = dma.hbm_to_vmem [thread:$0]  %s2, 256, %s188, [#allocation7], 128, 128, 8
        $region16: #{tpu_custom_call.1} parent=11 // pred_fallthru
          _
        // Predicated region
        $region17: #{tpu_custom_call.1} parent=11 // pred_check
          %p194 = pneg %p138
        $region18: #{tpu_custom_call.1} parent=11 // pred_check_branch
          %196 = sbr.rel (%p194) target = $region20
        $region19: #{tpu_custom_call.1} parent=11 // pred_region
          _
        $region20: #{tpu_custom_call.1} parent=11 // pred_fallthru
          _
      $region12: #{tpu_custom_call.1} parent=5 // pred_fallthru
        _
      %p197 = scmp.lt.s32.totalorder %s19, 2
      // Predicated region
      $region21: #{tpu_custom_call.1} parent=5 // pred_check
        %p198 = pneg %p197
      $region22: #{tpu_custom_call.1} parent=5 // pred_check_branch
        %200 = sbr.rel (%p198) target = $region24
      $region23: #{tpu_custom_call.1} parent=5 // pred_region
        // Predicated region
        $region25: #{tpu_custom_call.1} parent=23 // pred_check
          %p201 = pneg %p62
        $region26: #{tpu_custom_call.1} parent=23 // pred_check_branch
          %203 = sbr.rel (%p201) target = $region28
        $region27: #{tpu_custom_call.1} parent=23 // pred_region
          %s204 = sand.u32 %s52, 1
          %s205 = scalar_lea.sflag [#allocation4], %s204
          %s206 = sand.u32 %s52, 1
          %s207 = smul.addr %s206, 8
          %s208 = scalar_lea.vmem [#allocation3], %s207
          %s210 = ssub.s32 128, 128
          %211 = vsyncadd %s205, %s210
          %s212 = sadd.s32 %s28, %s27
          %s213 = sadd.s32 %s212, %s26
          %s214 = smul.addr %s213, 128
          %s215 = scalar_lea.hbm %s0, %s214
          %s217 = sshll.u32 %s208, 4
          %s218 = int_to_ptr.vmem [resolvable:$true] %s217
          %220 = dma.hbm_to_vmem [thread:$0]  %s215, 128, %s218, %s205
        $region28: #{tpu_custom_call.1} parent=23 // pred_fallthru
          _
        // Predicated region
        $region29: #{tpu_custom_call.1} parent=23 // pred_check
          %p221 = pneg %p90
        $region30: #{tpu_custom_call.1} parent=23 // pred_check_branch
          %223 = sbr.rel (%p221) target = $region32
        $region31: #{tpu_custom_call.1} parent=23 // pred_region
          %s224 = sand.u32 %s19, 1
          %s225 = scalar_lea.sflag [#allocation7], %s224
          %s226 = sand.u32 %s80, 1
          %s227 = smul.addr %s226, 8
          %s228 = scalar_lea.vmem [#allocation6], %s227
          %s230 = ssub.s32 128, 128
          %231 = vsyncadd %s225, %s230
          %s232 = sadd.s32 %s28, %s26
          %s233 = smul.addr %s232, 128
          %s234 = scalar_lea.hbm %s1, %s233
          %s236 = sshll.u32 %s228, 4
          %s237 = int_to_ptr.vmem [resolvable:$true] %s236
          %239 = dma.hbm_to_vmem [thread:$0]  %s234, 128, %s237, %s225
        $region32: #{tpu_custom_call.1} parent=23 // pred_fallthru
          _
      $region24: #{tpu_custom_call.1} parent=5 // pred_fallthru
        _
      %p240 = scmp.le.s32.totalorder 1, %s19
      %p241 = scmp.lt.s32.totalorder %s19, 3
      %p242 = pnand %p240, %p241
      %p243 = pneg %p242
      // Predicated region
      $region33: #{tpu_custom_call.1} parent=5 // pred_check
        _
      $region34: #{tpu_custom_call.1} parent=5 // pred_check_branch
        %245 = sbr.rel (%p242) target = $region36
      $region35: #{tpu_custom_call.1} parent=5 // pred_region
        %s246 = ssub.s32 %s19, 1
        %s247 = sand.u32 %s55, 1
        %s248 = scalar_lea.sflag [#allocation4], %s247
        %s249 = sand.u32 %s55, 1
        %s250 = smul.addr %s249, 8
        %s251 = scalar_lea.vmem [#allocation3], %s250
        // Predicated region
        $region37: #{tpu_custom_call.1} parent=35 // pred_check
          %p252 = pneg %p68
        $region38: #{tpu_custom_call.1} parent=35 // pred_check_branch
          %254 = sbr.rel (%p252) target = $region40
        $region39: #{tpu_custom_call.1} parent=35 // pred_region
          %255 = dma.done %s248, 128
        $region40: #{tpu_custom_call.1} parent=35 // pred_fallthru
          _
        %s256 = sand.u32 %s24, 1
        %s257 = scalar_lea.sflag [#allocation7], %s256
        %s258 = sand.u32 %s83, 1
        %s259 = smul.addr %s258, 8
        %s260 = scalar_lea.vmem [#allocation6], %s259
        // Predicated region
        $region41: #{tpu_custom_call.1} parent=35 // pred_check
          %p261 = pneg %p96
        $region42: #{tpu_custom_call.1} parent=35 // pred_check_branch
          %263 = sbr.rel (%p261) target = $region44
        $region43: #{tpu_custom_call.1} parent=35 // pred_region
          %264 = dma.done %s257, 128
        $region44: #{tpu_custom_call.1} parent=35 // pred_fallthru
          _
        // Predicated region
        $region45: #{tpu_custom_call.1} parent=35 // pred_check
          %p265 = pneg %p117
        $region46: #{tpu_custom_call.1} parent=35 // pred_check_branch
          %267 = sbr.rel (%p265) target = $region48
        $region47: #{tpu_custom_call.1} parent=35 // pred_region
          %268 = dma.done [#allocation7], 256
        $region48: #{tpu_custom_call.1} parent=35 // pred_fallthru
          _
        %s269 = sand.u32 %s55, 1
        %s270 = scalar_lea.sflag [#allocation4], %s269
        %s271 = sand.u32 %s55, 1
        %s272 = smul.addr %s271, 8
        %s273 = scalar_lea.vmem [#allocation3], %s272
        %p274 = pneg %p68
        %p275 = pneg %p65
        %s276 = sand.u32 %s24, 1
        %s277 = scalar_lea.sflag [#allocation7], %s276
        %s278 = sand.u32 %s83, 1
        %s279 = smul.addr %s278, 8
        %s280 = scalar_lea.vmem [#allocation6], %s279
        %p281 = pneg %p96
        %p282 = pneg %p93
        %p283 = pneg %p117
        %p284 = pneg %p114
        %p285 = pneg %p138
        %p286 = pneg %p135
        %p287 = pneg %p166
        %p288 = pneg %p163
        %s289 = sand.u32 %s153, 1
        %s290 = scalar_lea.sflag [#allocation5], %s289
        %s291 = sand.u32 %s153, 1
        %s292 = smul.addr %s291, 8
        %s293 = scalar_lea.vmem [#allocation9], %s292
        %v294 = vld [vmem:[%s251] sm:$0xff]
        %v295 = vld [vmem:[%s260] sm:$0xff]
        %p296 = scmp.eq.s32.totalorder %s31, 0
        // Predicated region
        $region49: #{tpu_custom_call.1} parent=35 // pred_check
          %p297 = pneg %p296
        $region50: #{tpu_custom_call.1} parent=35 // pred_check_branch
          %299 = sbr.rel (%p297) target = $region52
        $region51: #{tpu_custom_call.1} parent=35 // pred_region
          %vm300 = vcmask 130048
          %301 = vst.msk [vmem:[#allocation2] sm:$0xff] %vm300, 0.0
        $region52: #{tpu_custom_call.1} parent=35 // pred_fallthru
          _
        %v302 = vld [vmem:[#allocation2] sm:$0xff]
        %vm303 = vcmask 64512
        %v305 = vsel %vm303, %v294, 0
        %307 = vmatprep.subr.mxu0 0.0
        %308 = vmatpush1.msra.mxu0 0.0
        %309 = vmatprep.subr.mxu0 0.0
        %310 = vmatpush1.msra.mxu0 0.0
        %311 = vmatprep.subr.mxu0 0.0
        %312 = vmatpush1.msra.mxu0 0.0
        %313 = vmatprep.subr.mxu0 0.0
        %314 = vmatpush1.msra.mxu0 0.0
        %315 = vmatprep.subr.mxu0 0.0
        %316 = vmatpush1.msra.mxu0 0.0
        %317 = vmatprep.subr.mxu0 0.0
        %318 = vmatpush1.msra.mxu0 0.0
        %319 = vmatprep.subr.mxu0 0.0
        %320 = vmatpush1.msra.mxu0 0.0
        %321 = vmatprep.subr.mxu0 0.0
        %322 = vmatpush1.msra.mxu0 0.0
        %323 = vmatprep.subr.mxu0 0.0
        %324 = vmatpush1.msra.mxu0 0.0
        %325 = vmatprep.subr.mxu0 0.0
        %326 = vmatpush1.msra.mxu0 0.0
        %327 = vmatprep.subr.mxu0 0.0
        %328 = vmatpush1.msra.mxu0 0.0
        %329 = vmatprep.subr.mxu0 0.0
        %330 = vmatpush1.msra.mxu0 0.0
        %331 = vmatprep.subr.mxu0 0.0
        %332 = vmatpush1.msra.mxu0 0.0
        %333 = vmatprep.subr.mxu0 0.0
        %334 = vmatpush1.msra.mxu0 0.0
        %335 = vmatprep.subr.mxu0 0.0
        %336 = vmatpush1.msra.mxu0 0.0
        %337 = vmatprep.subr.mxu0 0.0
        %338 = vmatpush1.msra.mxu0 %v295
        %339 = vmatprep.subr.mxu0 0.0
        %340 = vmatpush2.msra.mxu0 0.0
        %341 = vmatprep.subr.mxu0 0.0
        %342 = vmatpush2.msra.mxu0 0.0
        %343 = vmatprep.subr.mxu0 0.0
        %344 = vmatpush2.msra.mxu0 0.0
        %345 = vmatprep.subr.mxu0 0.0
        %346 = vmatpush2.msra.mxu0 0.0
        %347 = vmatprep.subr.mxu0 0.0
        %348 = vmatpush2.msra.mxu0 0.0
        %349 = vmatprep.subr.mxu0 0.0
        %350 = vmatpush2.msra.mxu0 0.0
        %351 = vmatprep.subr.mxu0 0.0
        %352 = vmatpush2.msra.mxu0 0.0
        %353 = vmatprep.subr.mxu0 0.0
        %354 = vmatpush2.msra.mxu0 0.0
        %355 = vmatprep.subr.mxu0 0.0
        %356 = vmatpush2.msra.mxu0 0.0
        %357 = vmatprep.subr.mxu0 0.0
        %358 = vmatpush2.msra.mxu0 0.0
        %359 = vmatprep.subr.mxu0 0.0
        %360 = vmatpush2.msra.mxu0 0.0
        %361 = vmatprep.subr.mxu0 0.0
        %362 = vmatpush2.msra.mxu0 0.0
        %363 = vmatprep.subr.mxu0 0.0
        %364 = vmatpush2.msra.mxu0 0.0
        %365 = vmatprep.subr.mxu0 0.0
        %366 = vmatpush2.msra.mxu0 0.0
        %367 = vmatprep.subr.mxu0 0.0
        %368 = vmatpush2.msra.mxu0 0.0
        %369 = vmatprep.subr.mxu0 0.0
        %370 = vmatpush2.msra.mxu0 0.0
        %371 = vmatprep.mubr.f32.mxu0 0.0
        %372 = vmatmul.mubr.f32.gmra.mxu0 %v305
        %v373 = vpop.f32.mrf.mxu0
        %v374 = vadd.f32 0.0, %v373
        %v375 = vpop.f32.mrf.mxu0
        %376 = vdwg.mxu0
        %v377 = vadd.f32 %v302, %v374
        %vm378 = vcmask 130048
        %379 = vst.msk [vmem:[#allocation2] sm:$0xff] %vm378, %v377
        // Predicated region
        $region53: #{tpu_custom_call.1} parent=35 // pred_check
          %p380 = pneg %p296
        $region54: #{tpu_custom_call.1} parent=35 // pred_check_branch
          %382 = sbr.rel (%p380) target = $region56
        $region55: #{tpu_custom_call.1} parent=35 // pred_region
          %v383 = vld [vmem:[#allocation2] sm:$0xff]
          %v384 = vld [vmem:[#allocation8] sm:$0xff]
          %v385 = vld [vmem:[#allocation8 + $0x8] sm:$0xff]
          %v386 = vld [vmem:[%s3] sm:$0x1]
          %v388 = vlaneseq
          %v389 = vshrl.u32 %v388, 7
          %v390 = vsub.s32 0, %v389
          %v391 = vrot.slane %v386, %v390
          %v394 = vsel %vm378, %v383, 0
          %396 = vmatprep.subr.mxu0 0.0
          %397 = vmatpush1.msra.mxu0 0.0
          %398 = vmatprep.subr.mxu0 0.0
          %399 = vmatpush1.msra.mxu0 0.0
          %400 = vmatprep.subr.mxu0 0.0
          %401 = vmatpush1.msra.mxu0 0.0
          %402 = vmatprep.subr.mxu0 0.0
          %403 = vmatpush1.msra.mxu0 0.0
          %404 = vmatprep.subr.mxu0 0.0
          %405 = vmatpush1.msra.mxu0 0.0
          %406 = vmatprep.subr.mxu0 0.0
          %407 = vmatpush1.msra.mxu0 0.0
          %408 = vmatprep.subr.mxu0 0.0
          %409 = vmatpush1.msra.mxu0 0.0
          %410 = vmatprep.subr.mxu0 0.0
          %411 = vmatpush1.msra.mxu0 0.0
          %412 = vmatprep.subr.mxu0 0.0
          %413 = vmatpush1.msra.mxu0 0.0
          %414 = vmatprep.subr.mxu0 0.0
          %415 = vmatpush1.msra.mxu0 0.0
          %416 = vmatprep.subr.mxu0 0.0
          %417 = vmatpush1.msra.mxu0 0.0
          %418 = vmatprep.subr.mxu0 0.0
          %419 = vmatpush1.msra.mxu0 0.0
          %420 = vmatprep.subr.mxu0 0.0
          %421 = vmatpush1.msra.mxu0 0.0
          %422 = vmatprep.subr.mxu0 0.0
          %423 = vmatpush1.msra.mxu0 0.0
          %424 = vmatprep.subr.mxu0 0.0
          %425 = vmatpush1.msra.mxu0 %v385
          %426 = vmatprep.subr.mxu0 0.0
          %427 = vmatpush1.msra.mxu0 %v384
          %428 = vmatprep.subr.mxu0 0.0
          %429 = vmatpush2.msra.mxu0 0.0
          %430 = vmatprep.subr.mxu0 0.0
          %431 = vmatpush2.msra.mxu0 0.0
          %432 = vmatprep.subr.mxu0 0.0
          %433 = vmatpush2.msra.mxu0 0.0
          %434 = vmatprep.subr.mxu0 0.0
          %435 = vmatpush2.msra.mxu0 0.0
          %436 = vmatprep.subr.mxu0 0.0
          %437 = vmatpush2.msra.mxu0 0.0
          %438 = vmatprep.subr.mxu0 0.0
          %439 = vmatpush2.msra.mxu0 0.0
          %440 = vmatprep.subr.mxu0 0.0
          %441 = vmatpush2.msra.mxu0 0.0
          %442 = vmatprep.subr.mxu0 0.0
          %443 = vmatpush2.msra.mxu0 0.0
          %444 = vmatprep.subr.mxu0 0.0
          %445 = vmatpush2.msra.mxu0 0.0
          %446 = vmatprep.subr.mxu0 0.0
          %447 = vmatpush2.msra.mxu0 0.0
          %448 = vmatprep.subr.mxu0 0.0
          %449 = vmatpush2.msra.mxu0 0.0
          %450 = vmatprep.subr.mxu0 0.0
          %451 = vmatpush2.msra.mxu0 0.0
          %452 = vmatprep.subr.mxu0 0.0
          %453 = vmatpush2.msra.mxu0 0.0
          %454 = vmatprep.subr.mxu0 0.0
          %455 = vmatpush2.msra.mxu0 0.0
          %456 = vmatprep.subr.mxu0 0.0
          %457 = vmatpush2.msra.mxu0 0.0
          %458 = vmatprep.subr.mxu0 0.0
          %459 = vmatpush2.msra.mxu0 0.0
          %460 = vmatprep.mubr.f32.mxu0 0.0
          %461 = vmatmul.mubr.f32.gmra.mxu0 %v394
          %v462 = vpop.f32.mrf.mxu0
          %v463 = vadd.f32 %v391, %v462
          %v464 = vpop.f32.mrf.mxu0
          %465 = vdwg.mxu0
          %v466 = vxor.u32 %v463, 2147483648
          %v467 = vmul.f32 %v466, 1.442695
          %v468 = vpow.pop %v467
          %v469 = vadd.f32 %v468, 1.0
          %v470 = vrcp.pop %v469
          %v471 = vmul.f32 1.0, %v470
          %472 = vst [vmem:[%s293] sm:$0xff] %v471
        $region56: #{tpu_custom_call.1} parent=35 // pred_fallthru
          _
        %s473 = sand.u32 %s153, 1
        %s474 = scalar_lea.sflag [#allocation5], %s473
        %s475 = sand.u32 %s153, 1
        %s476 = smul.addr %s475, 8
        %s477 = scalar_lea.vmem [#allocation9], %s476
        // Predicated region
        $region57: #{tpu_custom_call.1} parent=35 // pred_check
          %p478 = pneg %p163
        $region58: #{tpu_custom_call.1} parent=35 // pred_check_branch
          %480 = sbr.rel (%p478) target = $region60
        $region59: #{tpu_custom_call.1} parent=35 // pred_region
          %s482 = ssub.s32 128, 128
          %483 = vsyncadd %s474, %s482
          %s484 = sadd.s32 %s30, %s29
          %s485 = smul.addr %s484, 128
          %s486 = scalar_lea.hbm %s4, %s485
          %s488 = sshll.u32 %s477, 4
          %s489 = int_to_ptr.vmem [resolvable:$true] %s488
          %491 = dma.vmem_to_hbm [thread:$0]  %s489, 128, %s486, %s474
        $region60: #{tpu_custom_call.1} parent=35 // pred_fallthru
          _
      $region36: #{tpu_custom_call.1} parent=5 // pred_fallthru
        _
      %p492 = scmp.le.s32.totalorder 2, %s19
      // Predicated region
      $region61: #{tpu_custom_call.1} parent=5 // pred_check
        %p493 = pneg %p492
      $region62: #{tpu_custom_call.1} parent=5 // pred_check_branch
        %495 = sbr.rel (%p493) target = $region64
      $region63: #{tpu_custom_call.1} parent=5 // pred_region
        %s496 = ssub.s32 %s19, 2
        // Predicated region
        $region65: #{tpu_custom_call.1} parent=63 // pred_check
          %p497 = pneg %p169
        $region66: #{tpu_custom_call.1} parent=63 // pred_check_branch
          %499 = sbr.rel (%p497) target = $region68
        $region67: #{tpu_custom_call.1} parent=63 // pred_region
          %s500 = sand.u32 %s154, 1
          %s501 = scalar_lea.sflag [#allocation5], %s500
          %s502 = sand.u32 %s154, 1
          %s503 = smul.addr %s502, 8
          %s504 = scalar_lea.vmem [#allocation9], %s503
          %505 = dma.done %s501, 128
        $region68: #{tpu_custom_call.1} parent=63 // pred_fallthru
          _
      $region64: #{tpu_custom_call.1} parent=5 // pred_fallthru
        _
    $region6: #{tpu_custom_call.1} parent=1 // loop_footer
      %s23 = sadd.s32 1, %s19
    $region7: #{tpu_custom_call.1} parent=1 // loop_footer_branch
      %18 = sbr.rel target = $region3
    $region8: #{tpu_custom_call.1} parent=1 // loop_exit
      _
    %506 = vsyncpa [#allocation4], 1
    %s507 = scalar_lea.sflag [#allocation4], 1
    %508 = vsyncpa %s507, 1
    %509 = vsyncpa [#allocation7], 1
    %s510 = scalar_lea.sflag [#allocation7], 1
    %511 = vsyncpa %s510, 1
    %512 = vsyncpa [#allocation5], 1
    %s513 = scalar_lea.sflag [#allocation5], 1
    %514 = vsyncpa %s513, 1

</llo_original>
